<compile_context>
chip_gen: v5e
topology: v5e:2x2
jax: 0.10.0
libtpu: 0.0.40
codegen_flags: <defaults>
</compile_context>

<pallas_src>
import jax
import jax.numpy as jnp
from jax import lax
from jax.experimental import pallas as pl
from jax.experimental.pallas import tpu as pltpu

# ---- scaled-down config (original module: MAX_LENGTH=100, VOCAB_SIZE=50, HIDDEN_IN=128)
MAX_LENGTH = 8      # num_embeddings AND LSTM num_layers (as written in the module)
VOCAB_SIZE = 16     # embedding_dim == LSTM input size
HIDDEN_IN = 32      # LSTM hidden size
LIN1_OUT = 32       # nn.Linear(HIDDEN_IN, 32)
SEQ_LEN = 8
BATCH = 2

# Streamed LSTM weights are bf16 (native MXU input on v5e/v6e/v7x); cell state,
# hidden state and all elementwise gate math remain f32 inside the kernel.
WEIGHT_DTYPE = jnp.bfloat16


def lstm_stack_kernel(emb_ref, wih_ref, whh_ref, b_ref, w_head_ref, b_head_ref,
                      out_ref, seq_ref, gates_ref):
    """One grid step == one LSTM layer.

    seq_ref   (T, H)  f32 VMEM scratch: previous layer's output sequence on entry;
                      overwritten in place with this layer's h, one row per step.
    gates_ref (T, 4H) f32 VMEM scratch: staged input projection x_seq @ Wih + b,
                      read one row per recurrence step (never live in vregs).
    Gate columns of Wih/Whh/bias are pre-permuted offline to (i, f, o, g).
    """
    layer = pl.program_id(0)
    last_layer = pl.num_programs(0) - 1
    T, H = seq_ref.shape

    # Layer 0 consumes the (zero-padded) embedded sequence; later layers consume
    # the previous layer's output already resident in seq_ref.
    @pl.when(layer == 0)
    def _():
        seq_ref[...] = emb_ref[...]

    # Hoisted input projection for the whole sequence: ONE (T,H)x(H,4H) MXU matmul
    # per layer, staged in VMEM so the recurrence only loads one row per step.
    gates_ref[...] = jnp.dot(
        seq_ref[...].astype(WEIGHT_DTYPE), wih_ref[0],
        preferred_element_type=jnp.float32) + b_ref[0].astype(jnp.float32)

    whh = whh_ref[0]                       # (H, 4H) bf16, loop-invariant MXU RHS
    # TODO(synk): at the real config (H=128, T=100) hold Whh resident in the MXU weight
    # registers across the recurrence (pltpu.matmul_push_rhs / matmul_acc_lhs /
    # matmul_pop) if the bundle dump shows Mosaic re-staging the RHS every step.

    def step(t, carry):
        h, c = carry                                             # (1, H) f32 each
        gates = gates_ref[pl.ds(t, 1), :] + jnp.dot(             # one VMEM row load
            h.astype(WEIGHT_DTYPE), whh, preferred_element_type=jnp.float32)
        # Gate order is (i, f, o, g): one contiguous 3H sigmoid + one H tanh (no
        # wasted sigmoid over the g quarter).  All elementwise math stays f32.
        sig = jax.nn.sigmoid(gates[:, :3 * H])
        g = jnp.tanh(gates[:, 3 * H:])
        c = sig[:, H:2 * H] * c + sig[:, :H] * g                 # f*c + i*g
        h = sig[:, 2 * H:3 * H] * jnp.tanh(c)                    # o * tanh(c)
        seq_ref[pl.ds(t, 1), :] = h                              # store h per step
        return h, c

    # T=8 here -> fully unrolled; at the real T=100 use unroll=8 so live ranges
    # (and spill traffic on the serial critical path) stay bounded.
    lax.fori_loop(
        0, T, step,
        (jnp.zeros((1, H), jnp.float32), jnp.zeros((1, H), jnp.float32)),
        unroll=True)

    @pl.when(layer == last_layer)
    def _():
        # Fused Linear(H,32) @ Linear(32,1) head (no nonlinearity between) + sigmoid.
        y = jnp.dot(seq_ref[...], w_head_ref[...],
                    preferred_element_type=jnp.float32) + b_head_ref[...]
        out_ref[...] = jax.nn.sigmoid(y)                         # (T, 1)


def _permute_gates_ifgo_to_ifog(w):
    """Reorder the last (4H) axis from PyTorch (i,f,g,o) order to (i,f,o,g)."""
    H = w.shape[-1] // 4
    return jnp.concatenate(
        [w[..., :2 * H], w[..., 3 * H:], w[..., 2 * H:3 * H]], axis=-1)


def network_forward(x_ids, params):
    H, E, L = HIDDEN_IN, VOCAB_SIZE, MAX_LENGTH

    # clsf[:, -1, :] on the (T, B, H) seq-first LSTM output keeps ONLY batch element
    # B-1 -> every other batch element is dead compute; gather & run just that one.
    emb = params["emb"][x_ids[:, -1]]                            # (T, E) f32
    T = emb.shape[0]

    # Zero-pad the layer-0 input E -> H so every layer consumes a (T,H) sequence and
    # an (H,4H) Wih block (one uniform streamed weight stack, one kernel code path).
    assert E <= H, "embedding_dim must be <= hidden size for the padded-layer-0 trick"
    emb_p = jnp.pad(emb, ((0, 0), (0, H - E)))                   # (T, H)
    wih0_p = jnp.pad(params["wih0_t"], ((0, H - E), (0, 0)))     # (H, 4H)

    wih_all = jnp.concatenate([wih0_p[None], params["wih_t"]], axis=0)            # (L,H,4H)
    whh_all = jnp.concatenate([params["whh0_t"][None], params["whh_t"]], axis=0)  # (L,H,4H)
    b_all = jnp.concatenate([params["b0"][None], params["b"]], axis=0)            # (L,1,4H)

    # (i,f,g,o) -> (i,f,o,g) column permutation + bf16 cast of the streamed weights.
    wih_all = _permute_gates_ifgo_to_ifog(wih_all).astype(WEIGHT_DTYPE)
    whh_all = _permute_gates_ifgo_to_ifog(whh_all).astype(WEIGHT_DTYPE)
    b_all = _permute_gates_ifgo_to_ifog(b_all).astype(WEIGHT_DTYPE)

    # Fuse the two head linears (no nonlinearity between them).
    w_head = params["w1_t"] @ params["w2_t"]                     # (H, 1)
    b_head = params["b1"] @ params["w2_t"] + params["b2"]        # (1, 1)

    const2 = lambda l: (0, 0)
    per_layer = lambda l: (l, 0, 0)                              # stream layer l's weights

    return pl.pallas_call(
        lstm_stack_kernel,
        out_shape=jax.ShapeDtypeStruct((T, 1), jnp.float32),
        grid_spec=pltpu.PrefetchScalarGridSpec(
            num_scalar_prefetch=0,
            grid=(L,),                                           # one grid step per layer
            in_specs=[
                pl.BlockSpec((T, H), const2),                    # padded embedded inputs
                pl.BlockSpec((1, H, 4 * H), per_layer),          # Wih (streamed, bf16)
                pl.BlockSpec((1, H, 4 * H), per_layer),          # Whh (streamed, bf16)
                pl.BlockSpec((1, 1, 4 * H), per_layer),          # bias b_ih+b_hh (bf16)
                pl.BlockSpec((H, 1), const2),                    # fused head weight
                pl.BlockSpec((1, 1), const2),                    # fused head bias
            ],
            out_specs=pl.BlockSpec((T, 1), const2),              # resident; written last layer
            scratch_shapes=[
                pltpu.VMEM((T, HIDDEN_IN), jnp.float32),         # layer output sequence
                pltpu.VMEM((T, 4 * HIDDEN_IN), jnp.float32),     # staged input projection
            ],
        ),
        compiler_params=pltpu.CompilerParams(
            # Layers are strictly serial (layer l+1 consumes layer l's sequence).
            dimension_semantics=("arbitrary",),
        ),
    )(emb_p, wih_all, whh_all, b_all, w_head, b_head)


def matched_reference(x_ids, params):
    """Pure-JAX replica of the kernel math (bf16 weights, surviving batch elem only)."""
    H, L = HIDDEN_IN, MAX_LENGTH
    seq = params["emb"][x_ids[:, -1]]                            # (T, E)
    wih_all = [params["wih0_t"]] + [params["wih_t"][l] for l in range(L - 1)]
    whh_all = [params["whh0_t"]] + [params["whh_t"][l] for l in range(L - 1)]
    b_all = [params["b0"]] + [params["b"][l] for l in range(L - 1)]
    for l in range(L):
        wih = wih_all[l].astype(WEIGHT_DTYPE)
        whh = whh_all[l].astype(WEIGHT_DTYPE)
        b = b_all[l].astype(WEIGHT_DTYPE).astype(jnp.float32)
        gates_in = jnp.dot(seq.astype(WEIGHT_DTYPE), wih,
                           preferred_element_type=jnp.float32) + b
        T = gates_in.shape[0]
        h = jnp.zeros((1, H), jnp.float32)
        c = jnp.zeros((1, H), jnp.float32)
        outs = []
        for t in range(T):
            gates = gates_in[t:t + 1] + jnp.dot(h.astype(WEIGHT_DTYPE), whh,
                                                preferred_element_type=jnp.float32)
            i = jax.nn.sigmoid(gates[:, :H])
            f = jax.nn.sigmoid(gates[:, H:2 * H])
            g = jnp.tanh(gates[:, 2 * H:3 * H])
            o = jax.nn.sigmoid(gates[:, 3 * H:])
            c = f * c + i * g
            h = o * jnp.tanh(c)
            outs.append(h)
        seq = jnp.concatenate(outs, axis=0)
    w_head = params["w1_t"] @ params["w2_t"]
    b_head = params["b1"] @ params["w2_t"] + params["b2"]
    return jax.nn.sigmoid(seq @ w_head + b_head)


def reference_forward(x_ids, params):
    """Pure-JAX f32 reference with the PyTorch module's semantics (full batch)."""
    emb = params["emb"][x_ids]                                   # (T, B, E)
    H = HIDDEN_IN

    def run_layer(x_seq, wih_t, whh_t, bias):
        T, B, _ = x_seq.shape
        h = jnp.zeros((B, H), jnp.float32)
        c = jnp.zeros((B, H), jnp.float32)
        outs = []
        for t in range(T):
            gates = x_seq[t] @ wih_t + h @ whh_t + bias
            i = jax.nn.sigmoid(gates[:, :H])
            f = jax.nn.sigmoid(gates[:, H:2 * H])
            g = jnp.tanh(gates[:, 2 * H:3 * H])
            o = jax.nn.sigmoid(gates[:, 3 * H:])
            c = f * c + i * g
            h = o * jnp.tanh(c)
            outs.append(h)
        return jnp.stack(outs)

    seq = run_layer(emb, params["wih0_t"], params["whh0_t"], params["b0"])
    for l in range(MAX_LENGTH - 1):
        seq = run_layer(seq, params["wih_t"][l], params["whh_t"][l], params["b"][l])
    last = seq[:, -1, :]                                         # PyTorch: last BATCH element
    y = last @ params["w1_t"] + params["b1"]
    y = y @ params["w2_t"] + params["b2"]
    return jax.nn.sigmoid(y)


def init_params(key):
    H, E, L = HIDDEN_IN, VOCAB_SIZE, MAX_LENGTH
    ks = jax.random.split(key, 12)
    s = 1.0 / float(H) ** 0.5

    def u(k, shape):
        return jax.random.uniform(k, shape, jnp.float32, -s, s)

    return {
        "emb": jax.random.normal(ks[0], (MAX_LENGTH, E), jnp.float32),
        # layer 0 (input size E); biases are the merged b_ih + b_hh
        "wih0_t": u(ks[1], (E, 4 * H)),
        "whh0_t": u(ks[2], (H, 4 * H)),
        "b0": u(ks[3], (1, 4 * H)),
        # layers 1 .. L-1 (input size H)
        "wih_t": u(ks[4], (L - 1, H, 4 * H)),
        "whh_t": u(ks[5], (L - 1, H, 4 * H)),
        "b": u(ks[6], (L - 1, 1, 4 * H)),
        # linear head
        "w1_t": u(ks[7], (H, LIN1_OUT)),
        "b1": u(ks[8], (1, LIN1_OUT)),
        "w2_t": u(ks[9], (LIN1_OUT, 1)),
        "b2": u(ks[10], (1, 1)),
    }


if __name__ == "__main__":
    key = jax.random.PRNGKey(0)
    pkey, xkey = jax.random.split(key)
    params = init_params(pkey)
    # token ids in [0, MAX_LENGTH), sequence-first (T, B)
    x = jax.random.randint(xkey, (SEQ_LEN, BATCH), 0, MAX_LENGTH, dtype=jnp.int32)

    out = jax.jit(network_forward)(x, params)
    out = jax.block_until_ready(out)
    assert out.shape == (SEQ_LEN, 1), out.shape

    # Tight check against a pure-JAX replica of the exact kernel math (bf16 weights).
    ref_m = matched_reference(x, params)
    assert jnp.allclose(out, ref_m, atol=1e-3, rtol=1e-3), (out, ref_m)

    # Looser check against the f32 PyTorch-module semantics (tolerance covers the
    # bf16 weight quantization applied in the kernel's weight stream).
    ref = reference_forward(x, params)
    assert jnp.allclose(out, ref, atol=5e-2, rtol=5e-2), (out, ref)
    print("KERNEL_OK")
</pallas_src>

<mosaic_0001>
module attributes {stable_mosaic.version = 11 : i64} {
  func.func @lstm_stack_kernel(%arg0: i32, %arg1: memref<8x32xf32, #tpu.memory_space<vmem>>, %arg2: memref<1x32x128xbf16, #tpu.memory_space<vmem>>, %arg3: memref<1x32x128xbf16, #tpu.memory_space<vmem>>, %arg4: memref<1x1x128xbf16, #tpu.memory_space<vmem>>, %arg5: memref<32x1xf32, #tpu.memory_space<vmem>>, %arg6: memref<1x1xf32, #tpu.memory_space<vmem>>, %arg7: memref<8x1xf32, #tpu.memory_space<vmem>>, %arg8: memref<8x32xf32, #tpu.memory_space<vmem>>, %arg9: memref<8x128xf32, #tpu.memory_space<vmem>>) attributes {dimension_semantics = [#tpu.dimension_semantics<arbitrary>], iteration_bounds = array<i64: 8>, scalar_prefetch = 0 : i64, scratch_operands = 2 : i64, tpu.core_type = #tpu.core_type<tc>, window_params = [{pipeline_mode = #tpu.pipeline_mode<synchronous>, transform_indices = @transform_0, window_bounds = array<i64: 8, 32>}, {transform_indices = @transform_1, window_bounds = array<i64: 1, 32, 128>}, {transform_indices = @transform_2, window_bounds = array<i64: 1, 32, 128>}, {transform_indices = @transform_3, window_bounds = array<i64: 1, 1, 128>}, {pipeline_mode = #tpu.pipeline_mode<synchronous>, transform_indices = @transform_4, window_bounds = array<i64: 32, 1>}, {pipeline_mode = #tpu.pipeline_mode<synchronous>, transform_indices = @transform_5, window_bounds = array<i64: 1, 1>}, {pipeline_mode = #tpu.pipeline_mode<synchronous>, transform_indices = @transform_6, window_bounds = array<i64: 8, 1>}]} {
    %c0_i32 = arith.constant 0 : i32
    %0 = arith.cmpi eq, %arg0, %c0_i32 : i32
    %1 = arith.extui %0 : i1 to i32
    %c0_i32_0 = arith.constant 0 : i32
    %2 = arith.cmpi ne, %1, %c0_i32_0 : i32
    scf.if %2 {
      %c0_50 = arith.constant 0 : index
      %c0_51 = arith.constant 0 : index
      %205 = vector.load %arg1[%c0_50, %c0_51] : memref<8x32xf32, #tpu.memory_space<vmem>>, vector<8x32xf32>
      %c0_52 = arith.constant 0 : index
      %c0_53 = arith.constant 0 : index
      %206 = vector.load %arg8[%c0_52, %c0_53] : memref<8x32xf32, #tpu.memory_space<vmem>>, vector<8x32xf32>
      tpu.vector_store %arg8[%c0_52, %c0_53], %205 {strides = array<i32>} : memref<8x32xf32, #tpu.memory_space<vmem>>, vector<8x32xf32>,
    } else {
    }
    %c0 = arith.constant 0 : index
    %c0_1 = arith.constant 0 : index
    %3 = vector.load %arg8[%c0, %c0_1] : memref<8x32xf32, #tpu.memory_space<vmem>>, vector<8x32xf32>
    %4 = arith.truncf %3 : vector<8x32xf32> to vector<8x32xbf16>
    %c0_2 = arith.constant 0 : index
    %c0_3 = arith.constant 0 : index
    %c0_4 = arith.constant 0 : index
    %5 = vector.load %arg2[%c0_2, %c0_3, %c0_4] : memref<1x32x128xbf16, #tpu.memory_space<vmem>>, vector<1x32x128xbf16>
    %6 = vector.shape_cast %5 : vector<1x32x128xbf16> to vector<32x128xbf16>
    %cst = arith.constant dense<0.000000e+00> : vector<8x128xf32>
    %7 = tpu.matmul %4, %6, %cst {dimension_numbers = #tpu.dot_dimension_numbers<[1], [0], [0], [1], [0, 0, 1, 1], [], []>} : vector<8x32xbf16>, vector<32x128xbf16>, vector<8x128xf32> -> vector<8x128xf32>
    %c0_5 = arith.constant 0 : index
    %c0_6 = arith.constant 0 : index
    %c0_7 = arith.constant 0 : index
    %8 = vector.load %arg4[%c0_5, %c0_6, %c0_7] : memref<1x1x128xbf16, #tpu.memory_space<vmem>>, vector<1x1x128xbf16>
    %9 = vector.shape_cast %8 : vector<1x1x128xbf16> to vector<1x128xbf16>
    %10 = arith.extf %9 : vector<1x128xbf16> to vector<1x128xf32>
    %11 = vector.broadcast %10 : vector<1x128xf32> to vector<8x128xf32>
    %12 = arith.addf %7, %11 : vector<8x128xf32>
    %c0_8 = arith.constant 0 : index
    %c0_9 = arith.constant 0 : index
    %13 = vector.load %arg9[%c0_8, %c0_9] : memref<8x128xf32, #tpu.memory_space<vmem>>, vector<8x128xf32>
    tpu.vector_store %arg9[%c0_8, %c0_9], %12 {strides = array<i32>} : memref<8x128xf32, #tpu.memory_space<vmem>>, vector<8x128xf32>,
    %c0_10 = arith.constant 0 : index
    %c0_11 = arith.constant 0 : index
    %c0_12 = arith.constant 0 : index
    %14 = vector.load %arg3[%c0_10, %c0_11, %c0_12] : memref<1x32x128xbf16, #tpu.memory_space<vmem>>, vector<1x32x128xbf16>
    %15 = vector.shape_cast %14 : vector<1x32x128xbf16> to vector<32x128xbf16>
    %cst_13 = arith.constant 0.000000e+00 : f32
    %16 = vector.broadcast %cst_13 : f32 to vector<1x32xf32>
    %cst_14 = arith.constant 0.000000e+00 : f32
    %17 = vector.broadcast %cst_14 : f32 to vector<1x32xf32>
    %c0_i32_15 = arith.constant 0 : i32
    %18 = arith.index_cast %c0_i32_15 : i32 to index
    %c0_16 = arith.constant 0 : index
    %19 = vector.load %arg9[%18, %c0_16] : memref<8x128xf32, #tpu.memory_space<vmem>>, vector<1x128xf32>
    %20 = arith.truncf %16 : vector<1x32xf32> to vector<1x32xbf16>
    %cst_17 = arith.constant dense<0.000000e+00> : vector<1x128xf32>
    %21 = tpu.matmul %20, %15, %cst_17 {dimension_numbers = #tpu.dot_dimension_numbers<[1], [0], [0], [1], [0, 0, 1, 1], [], []>} : vector<1x32xbf16>, vector<32x128xbf16>, vector<1x128xf32> -> vector<1x128xf32>
    %22 = arith.addf %19, %21 : vector<1x128xf32>
    %23 = vector.extract_strided_slice %22 {offsets = [0, 0], sizes = [1, 96], strides = [1, 1]} : vector<1x128xf32> to vector<1x96xf32>
    %24 = arith.negf %23 : vector<1x96xf32>
    %25 = math.exp %24 : vector<1x96xf32>
    %cst_18 = arith.constant 1.000000e+00 : f32
    %26 = vector.broadcast %cst_18 : f32 to vector<1x96xf32>
    %27 = arith.addf %26, %25 : vector<1x96xf32>
    %28 = arith.divf %26, %27 : vector<1x96xf32>
    %29 = vector.extract_strided_slice %22 {offsets = [0, 96], sizes = [1, 32], strides = [1, 1]} : vector<1x128xf32> to vector<1x32xf32>
    %30 = math.tanh %29 : vector<1x32xf32>
    %31 = vector.extract_strided_slice %28 {offsets = [0, 32], sizes = [1, 32], strides = [1, 1]} : vector<1x96xf32> to vector<1x32xf32>
    %32 = arith.mulf %31, %17 : vector<1x32xf32>
    %33 = vector.extract_strided_slice %28 {offsets = [0, 0], sizes = [1, 32], strides = [1, 1]} : vector<1x96xf32> to vector<1x32xf32>
    %34 = arith.mulf %33, %30 : vector<1x32xf32>
    %35 = arith.addf %32, %34 : vector<1x32xf32>
    %36 = vector.extract_strided_slice %28 {offsets = [0, 64], sizes = [1, 32], strides = [1, 1]} : vector<1x96xf32> to vector<1x32xf32>
    %37 = math.tanh %35 : vector<1x32xf32>
    %38 = arith.mulf %36, %37 : vector<1x32xf32>
    %39 = arith.index_cast %c0_i32_15 : i32 to index
    %c0_19 = arith.constant 0 : index
    %40 = vector.load %arg8[%39, %c0_19] : memref<8x32xf32, #tpu.memory_space<vmem>>, vector<1x32xf32>
    tpu.vector_store %arg8[%39, %c0_19], %38 {strides = array<i32>} : memref<8x32xf32, #tpu.memory_space<vmem>>, vector<1x32xf32>,
    %c1_i32 = arith.constant 1 : i32
    %41 = arith.index_cast %c1_i32 : i32 to index
    %c0_20 = arith.constant 0 : index
    %42 = vector.load %arg9[%41, %c0_20] : memref<8x128xf32, #tpu.memory_space<vmem>>, vector<1x128xf32>
    %43 = arith.truncf %38 : vector<1x32xf32> to vector<1x32xbf16>
    %cst_21 = arith.constant dense<0.000000e+00> : vector<1x128xf32>
    %44 = tpu.matmul %43, %15, %cst_21 {dimension_numbers = #tpu.dot_dimension_numbers<[1], [0], [0], [1], [0, 0, 1, 1], [], []>} : vector<1x32xbf16>, vector<32x128xbf16>, vector<1x128xf32> -> vector<1x128xf32>
    %45 = arith.addf %42, %44 : vector<1x128xf32>
    %46 = vector.extract_strided_slice %45 {offsets = [0, 0], sizes = [1, 96], strides = [1, 1]} : vector<1x128xf32> to vector<1x96xf32>
    %47 = arith.negf %46 : vector<1x96xf32>
    %48 = math.exp %47 : vector<1x96xf32>
    %cst_22 = arith.constant 1.000000e+00 : f32
    %49 = vector.broadcast %cst_22 : f32 to vector<1x96xf32>
    %50 = arith.addf %49, %48 : vector<1x96xf32>
    %51 = arith.divf %49, %50 : vector<1x96xf32>
    %52 = vector.extract_strided_slice %45 {offsets = [0, 96], sizes = [1, 32], strides = [1, 1]} : vector<1x128xf32> to vector<1x32xf32>
    %53 = math.tanh %52 : vector<1x32xf32>
    %54 = vector.extract_strided_slice %51 {offsets = [0, 32], sizes = [1, 32], strides = [1, 1]} : vector<1x96xf32> to vector<1x32xf32>
    %55 = arith.mulf %54, %35 : vector<1x32xf32>
    %56 = vector.extract_strided_slice %51 {offsets = [0, 0], sizes = [1, 32], strides = [1, 1]} : vector<1x96xf32> to vector<1x32xf32>
    %57 = arith.mulf %56, %53 : vector<1x32xf32>
    %58 = arith.addf %55, %57 : vector<1x32xf32>
    %59 = vector.extract_strided_slice %51 {offsets = [0, 64], sizes = [1, 32], strides = [1, 1]} : vector<1x96xf32> to vector<1x32xf32>
    %60 = math.tanh %58 : vector<1x32xf32>
    %61 = arith.mulf %59, %60 : vector<1x32xf32>
    %62 = arith.index_cast %c1_i32 : i32 to index
    %c0_23 = arith.constant 0 : index
    %63 = vector.load %arg8[%62, %c0_23] : memref<8x32xf32, #tpu.memory_space<vmem>>, vector<1x32xf32>
    tpu.vector_store %arg8[%62, %c0_23], %61 {strides = array<i32>} : memref<8x32xf32, #tpu.memory_space<vmem>>, vector<1x32xf32>,
    %c2_i32 = arith.constant 2 : i32
    %64 = arith.index_cast %c2_i32 : i32 to index
    %c0_24 = arith.constant 0 : index
    %65 = vector.load %arg9[%64, %c0_24] : memref<8x128xf32, #tpu.memory_space<vmem>>, vector<1x128xf32>
    %66 = arith.truncf %61 : vector<1x32xf32> to vector<1x32xbf16>
    %cst_25 = arith.constant dense<0.000000e+00> : vector<1x128xf32>
    %67 = tpu.matmul %66, %15, %cst_25 {dimension_numbers = #tpu.dot_dimension_numbers<[1], [0], [0], [1], [0, 0, 1, 1], [], []>} : vector<1x32xbf16>, vector<32x128xbf16>, vector<1x128xf32> -> vector<1x128xf32>
    %68 = arith.addf %65, %67 : vector<1x128xf32>
    %69 = vector.extract_strided_slice %68 {offsets = [0, 0], sizes = [1, 96], strides = [1, 1]} : vector<1x128xf32> to vector<1x96xf32>
    %70 = arith.negf %69 : vector<1x96xf32>
    %71 = math.exp %70 : vector<1x96xf32>
    %cst_26 = arith.constant 1.000000e+00 : f32
    %72 = vector.broadcast %cst_26 : f32 to vector<1x96xf32>
    %73 = arith.addf %72, %71 : vector<1x96xf32>
    %74 = arith.divf %72, %73 : vector<1x96xf32>
    %75 = vector.extract_strided_slice %68 {offsets = [0, 96], sizes = [1, 32], strides = [1, 1]} : vector<1x128xf32> to vector<1x32xf32>
    %76 = math.tanh %75 : vector<1x32xf32>
    %77 = vector.extract_strided_slice %74 {offsets = [0, 32], sizes = [1, 32], strides = [1, 1]} : vector<1x96xf32> to vector<1x32xf32>
    %78 = arith.mulf %77, %58 : vector<1x32xf32>
    %79 = vector.extract_strided_slice %74 {offsets = [0, 0], sizes = [1, 32], strides = [1, 1]} : vector<1x96xf32> to vector<1x32xf32>
    %80 = arith.mulf %79, %76 : vector<1x32xf32>
    %81 = arith.addf %78, %80 : vector<1x32xf32>
    %82 = vector.extract_strided_slice %74 {offsets = [0, 64], sizes = [1, 32], strides = [1, 1]} : vector<1x96xf32> to vector<1x32xf32>
    %83 = math.tanh %81 : vector<1x32xf32>
    %84 = arith.mulf %82, %83 : vector<1x32xf32>
    %85 = arith.index_cast %c2_i32 : i32 to index
    %c0_27 = arith.constant 0 : index
    %86 = vector.load %arg8[%85, %c0_27] : memref<8x32xf32, #tpu.memory_space<vmem>>, vector<1x32xf32>
    tpu.vector_store %arg8[%85, %c0_27], %84 {strides = array<i32>} : memref<8x32xf32, #tpu.memory_space<vmem>>, vector<1x32xf32>,
    %c3_i32 = arith.constant 3 : i32
    %87 = arith.index_cast %c3_i32 : i32 to index
    %c0_28 = arith.constant 0 : index
    %88 = vector.load %arg9[%87, %c0_28] : memref<8x128xf32, #tpu.memory_space<vmem>>, vector<1x128xf32>
    %89 = arith.truncf %84 : vector<1x32xf32> to vector<1x32xbf16>
    %cst_29 = arith.constant dense<0.000000e+00> : vector<1x128xf32>
    %90 = tpu.matmul %89, %15, %cst_29 {dimension_numbers = #tpu.dot_dimension_numbers<[1], [0], [0], [1], [0, 0, 1, 1], [], []>} : vector<1x32xbf16>, vector<32x128xbf16>, vector<1x128xf32> -> vector<1x128xf32>
    %91 = arith.addf %88, %90 : vector<1x128xf32>
    %92 = vector.extract_strided_slice %91 {offsets = [0, 0], sizes = [1, 96], strides = [1, 1]} : vector<1x128xf32> to vector<1x96xf32>
    %93 = arith.negf %92 : vector<1x96xf32>
    %94 = math.exp %93 : vector<1x96xf32>
    %cst_30 = arith.constant 1.000000e+00 : f32
    %95 = vector.broadcast %cst_30 : f32 to vector<1x96xf32>
    %96 = arith.addf %95, %94 : vector<1x96xf32>
    %97 = arith.divf %95, %96 : vector<1x96xf32>
    %98 = vector.extract_strided_slice %91 {offsets = [0, 96], sizes = [1, 32], strides = [1, 1]} : vector<1x128xf32> to vector<1x32xf32>
    %99 = math.tanh %98 : vector<1x32xf32>
    %100 = vector.extract_strided_slice %97 {offsets = [0, 32], sizes = [1, 32], strides = [1, 1]} : vector<1x96xf32> to vector<1x32xf32>
    %101 = arith.mulf %100, %81 : vector<1x32xf32>
    %102 = vector.extract_strided_slice %97 {offsets = [0, 0], sizes = [1, 32], strides = [1, 1]} : vector<1x96xf32> to vector<1x32xf32>
    %103 = arith.mulf %102, %99 : vector<1x32xf32>
    %104 = arith.addf %101, %103 : vector<1x32xf32>
    %105 = vector.extract_strided_slice %97 {offsets = [0, 64], sizes = [1, 32], strides = [1, 1]} : vector<1x96xf32> to vector<1x32xf32>
    %106 = math.tanh %104 : vector<1x32xf32>
    %107 = arith.mulf %105, %106 : vector<1x32xf32>
    %108 = arith.index_cast %c3_i32 : i32 to index
    %c0_31 = arith.constant 0 : index
    %109 = vector.load %arg8[%108, %c0_31] : memref<8x32xf32, #tpu.memory_space<vmem>>, vector<1x32xf32>
    tpu.vector_store %arg8[%108, %c0_31], %107 {strides = array<i32>} : memref<8x32xf32, #tpu.memory_space<vmem>>, vector<1x32xf32>,
    %c4_i32 = arith.constant 4 : i32
    %110 = arith.index_cast %c4_i32 : i32 to index
    %c0_32 = arith.constant 0 : index
    %111 = vector.load %arg9[%110, %c0_32] : memref<8x128xf32, #tpu.memory_space<vmem>>, vector<1x128xf32>
    %112 = arith.truncf %107 : vector<1x32xf32> to vector<1x32xbf16>
    %cst_33 = arith.constant dense<0.000000e+00> : vector<1x128xf32>
    %113 = tpu.matmul %112, %15, %cst_33 {dimension_numbers = #tpu.dot_dimension_numbers<[1], [0], [0], [1], [0, 0, 1, 1], [], []>} : vector<1x32xbf16>, vector<32x128xbf16>, vector<1x128xf32> -> vector<1x128xf32>
    %114 = arith.addf %111, %113 : vector<1x128xf32>
    %115 = vector.extract_strided_slice %114 {offsets = [0, 0], sizes = [1, 96], strides = [1, 1]} : vector<1x128xf32> to vector<1x96xf32>
    %116 = arith.negf %115 : vector<1x96xf32>
    %117 = math.exp %116 : vector<1x96xf32>
    %cst_34 = arith.constant 1.000000e+00 : f32
    %118 = vector.broadcast %cst_34 : f32 to vector<1x96xf32>
    %119 = arith.addf %118, %117 : vector<1x96xf32>
    %120 = arith.divf %118, %119 : vector<1x96xf32>
    %121 = vector.extract_strided_slice %114 {offsets = [0, 96], sizes = [1, 32], strides = [1, 1]} : vector<1x128xf32> to vector<1x32xf32>
    %122 = math.tanh %121 : vector<1x32xf32>
    %123 = vector.extract_strided_slice %120 {offsets = [0, 32], sizes = [1, 32], strides = [1, 1]} : vector<1x96xf32> to vector<1x32xf32>
    %124 = arith.mulf %123, %104 : vector<1x32xf32>
    %125 = vector.extract_strided_slice %120 {offsets = [0, 0], sizes = [1, 32], strides = [1, 1]} : vector<1x96xf32> to vector<1x32xf32>
    %126 = arith.mulf %125, %122 : vector<1x32xf32>
    %127 = arith.addf %124, %126 : vector<1x32xf32>
    %128 = vector.extract_strided_slice %120 {offsets = [0, 64], sizes = [1, 32], strides = [1, 1]} : vector<1x96xf32> to vector<1x32xf32>
    %129 = math.tanh %127 : vector<1x32xf32>
    %130 = arith.mulf %128, %129 : vector<1x32xf32>
    %131 = arith.index_cast %c4_i32 : i32 to index
    %c0_35 = arith.constant 0 : index
    %132 = vector.load %arg8[%131, %c0_35] : memref<8x32xf32, #tpu.memory_space<vmem>>, vector<1x32xf32>
    tpu.vector_store %arg8[%131, %c0_35], %130 {strides = array<i32>} : memref<8x32xf32, #tpu.memory_space<vmem>>, vector<1x32xf32>,
    %c5_i32 = arith.constant 5 : i32
    %133 = arith.index_cast %c5_i32 : i32 to index
    %c0_36 = arith.constant 0 : index
    %134 = vector.load %arg9[%133, %c0_36] : memref<8x128xf32, #tpu.memory_space<vmem>>, vector<1x128xf32>
    %135 = arith.truncf %130 : vector<1x32xf32> to vector<1x32xbf16>
    %cst_37 = arith.constant dense<0.000000e+00> : vector<1x128xf32>
    %136 = tpu.matmul %135, %15, %cst_37 {dimension_numbers = #tpu.dot_dimension_numbers<[1], [0], [0], [1], [0, 0, 1, 1], [], []>} : vector<1x32xbf16>, vector<32x128xbf16>, vector<1x128xf32> -> vector<1x128xf32>
    %137 = arith.addf %134, %136 : vector<1x128xf32>
    %138 = vector.extract_strided_slice %137 {offsets = [0, 0], sizes = [1, 96], strides = [1, 1]} : vector<1x128xf32> to vector<1x96xf32>
    %139 = arith.negf %138 : vector<1x96xf32>
    %140 = math.exp %139 : vector<1x96xf32>
    %cst_38 = arith.constant 1.000000e+00 : f32
    %141 = vector.broadcast %cst_38 : f32 to vector<1x96xf32>
    %142 = arith.addf %141, %140 : vector<1x96xf32>
    %143 = arith.divf %141, %142 : vector<1x96xf32>
    %144 = vector.extract_strided_slice %137 {offsets = [0, 96], sizes = [1, 32], strides = [1, 1]} : vector<1x128xf32> to vector<1x32xf32>
    %145 = math.tanh %144 : vector<1x32xf32>
    %146 = vector.extract_strided_slice %143 {offsets = [0, 32], sizes = [1, 32], strides = [1, 1]} : vector<1x96xf32> to vector<1x32xf32>
    %147 = arith.mulf %146, %127 : vector<1x32xf32>
    %148 = vector.extract_strided_slice %143 {offsets = [0, 0], sizes = [1, 32], strides = [1, 1]} : vector<1x96xf32> to vector<1x32xf32>
    %149 = arith.mulf %148, %145 : vector<1x32xf32>
    %150 = arith.addf %147, %149 : vector<1x32xf32>
    %151 = vector.extract_strided_slice %143 {offsets = [0, 64], sizes = [1, 32], strides = [1, 1]} : vector<1x96xf32> to vector<1x32xf32>
    %152 = math.tanh %150 : vector<1x32xf32>
    %153 = arith.mulf %151, %152 : vector<1x32xf32>
    %154 = arith.index_cast %c5_i32 : i32 to index
    %c0_39 = arith.constant 0 : index
    %155 = vector.load %arg8[%154, %c0_39] : memref<8x32xf32, #tpu.memory_space<vmem>>, vector<1x32xf32>
    tpu.vector_store %arg8[%154, %c0_39], %153 {strides = array<i32>} : memref<8x32xf32, #tpu.memory_space<vmem>>, vector<1x32xf32>,
    %c6_i32 = arith.constant 6 : i32
    %156 = arith.index_cast %c6_i32 : i32 to index
    %c0_40 = arith.constant 0 : index
    %157 = vector.load %arg9[%156, %c0_40] : memref<8x128xf32, #tpu.memory_space<vmem>>, vector<1x128xf32>
    %158 = arith.truncf %153 : vector<1x32xf32> to vector<1x32xbf16>
    %cst_41 = arith.constant dense<0.000000e+00> : vector<1x128xf32>
    %159 = tpu.matmul %158, %15, %cst_41 {dimension_numbers = #tpu.dot_dimension_numbers<[1], [0], [0], [1], [0, 0, 1, 1], [], []>} : vector<1x32xbf16>, vector<32x128xbf16>, vector<1x128xf32> -> vector<1x128xf32>
    %160 = arith.addf %157, %159 : vector<1x128xf32>
    %161 = vector.extract_strided_slice %160 {offsets = [0, 0], sizes = [1, 96], strides = [1, 1]} : vector<1x128xf32> to vector<1x96xf32>
    %162 = arith.negf %161 : vector<1x96xf32>
    %163 = math.exp %162 : vector<1x96xf32>
    %cst_42 = arith.constant 1.000000e+00 : f32
    %164 = vector.broadcast %cst_42 : f32 to vector<1x96xf32>
    %165 = arith.addf %164, %163 : vector<1x96xf32>
    %166 = arith.divf %164, %165 : vector<1x96xf32>
    %167 = vector.extract_strided_slice %160 {offsets = [0, 96], sizes = [1, 32], strides = [1, 1]} : vector<1x128xf32> to vector<1x32xf32>
    %168 = math.tanh %167 : vector<1x32xf32>
    %169 = vector.extract_strided_slice %166 {offsets = [0, 32], sizes = [1, 32], strides = [1, 1]} : vector<1x96xf32> to vector<1x32xf32>
    %170 = arith.mulf %169, %150 : vector<1x32xf32>
    %171 = vector.extract_strided_slice %166 {offsets = [0, 0], sizes = [1, 32], strides = [1, 1]} : vector<1x96xf32> to vector<1x32xf32>
    %172 = arith.mulf %171, %168 : vector<1x32xf32>
    %173 = arith.addf %170, %172 : vector<1x32xf32>
    %174 = vector.extract_strided_slice %166 {offsets = [0, 64], sizes = [1, 32], strides = [1, 1]} : vector<1x96xf32> to vector<1x32xf32>
    %175 = math.tanh %173 : vector<1x32xf32>
    %176 = arith.mulf %174, %175 : vector<1x32xf32>
    %177 = arith.index_cast %c6_i32 : i32 to index
    %c0_43 = arith.constant 0 : index
    %178 = vector.load %arg8[%177, %c0_43] : memref<8x32xf32, #tpu.memory_space<vmem>>, vector<1x32xf32>
    tpu.vector_store %arg8[%177, %c0_43], %176 {strides = array<i32>} : memref<8x32xf32, #tpu.memory_space<vmem>>, vector<1x32xf32>,
    %c7_i32 = arith.constant 7 : i32
    %179 = arith.index_cast %c7_i32 : i32 to index
    %c0_44 = arith.constant 0 : index
    %180 = vector.load %arg9[%179, %c0_44] : memref<8x128xf32, #tpu.memory_space<vmem>>, vector<1x128xf32>
    %181 = arith.truncf %176 : vector<1x32xf32> to vector<1x32xbf16>
    %cst_45 = arith.constant dense<0.000000e+00> : vector<1x128xf32>
    %182 = tpu.matmul %181, %15, %cst_45 {dimension_numbers = #tpu.dot_dimension_numbers<[1], [0], [0], [1], [0, 0, 1, 1], [], []>} : vector<1x32xbf16>, vector<32x128xbf16>, vector<1x128xf32> -> vector<1x128xf32>
    %183 = arith.addf %180, %182 : vector<1x128xf32>
    %184 = vector.extract_strided_slice %183 {offsets = [0, 0], sizes = [1, 96], strides = [1, 1]} : vector<1x128xf32> to vector<1x96xf32>
    %185 = arith.negf %184 : vector<1x96xf32>
    %186 = math.exp %185 : vector<1x96xf32>
    %cst_46 = arith.constant 1.000000e+00 : f32
    %187 = vector.broadcast %cst_46 : f32 to vector<1x96xf32>
    %188 = arith.addf %187, %186 : vector<1x96xf32>
    %189 = arith.divf %187, %188 : vector<1x96xf32>
    %190 = vector.extract_strided_slice %183 {offsets = [0, 96], sizes = [1, 32], strides = [1, 1]} : vector<1x128xf32> to vector<1x32xf32>
    %191 = math.tanh %190 : vector<1x32xf32>
    %192 = vector.extract_strided_slice %189 {offsets = [0, 32], sizes = [1, 32], strides = [1, 1]} : vector<1x96xf32> to vector<1x32xf32>
    %193 = arith.mulf %192, %173 : vector<1x32xf32>
    %194 = vector.extract_strided_slice %189 {offsets = [0, 0], sizes = [1, 32], strides = [1, 1]} : vector<1x96xf32> to vector<1x32xf32>
    %195 = arith.mulf %194, %191 : vector<1x32xf32>
    %196 = arith.addf %193, %195 : vector<1x32xf32>
    %197 = vector.extract_strided_slice %189 {offsets = [0, 64], sizes = [1, 32], strides = [1, 1]} : vector<1x96xf32> to vector<1x32xf32>
    %198 = math.tanh %196 : vector<1x32xf32>
    %199 = arith.mulf %197, %198 : vector<1x32xf32>
    %200 = arith.index_cast %c7_i32 : i32 to index
    %c0_47 = arith.constant 0 : index
    %201 = vector.load %arg8[%200, %c0_47] : memref<8x32xf32, #tpu.memory_space<vmem>>, vector<1x32xf32>
    tpu.vector_store %arg8[%200, %c0_47], %199 {strides = array<i32>} : memref<8x32xf32, #tpu.memory_space<vmem>>, vector<1x32xf32>,
    %c8_i32 = arith.constant 8 : i32
    %c7_i32_48 = arith.constant 7 : i32
    %202 = arith.cmpi eq, %arg0, %c7_i32_48 : i32
    %203 = arith.extui %202 : i1 to i32
    %c0_i32_49 = arith.constant 0 : i32
    %204 = arith.cmpi ne, %203, %c0_i32_49 : i32
    scf.if %204 {
      %c0_50 = arith.constant 0 : index
      %c0_51 = arith.constant 0 : index
      %205 = vector.load %arg8[%c0_50, %c0_51] : memref<8x32xf32, #tpu.memory_space<vmem>>, vector<8x32xf32>
      %c0_52 = arith.constant 0 : index
      %c0_53 = arith.constant 0 : index
      %206 = vector.load %arg5[%c0_52, %c0_53] : memref<32x1xf32, #tpu.memory_space<vmem>>, vector<32x1xf32>
      %cst_54 = arith.constant dense<0.000000e+00> : vector<8x1xf32>
      %207 = tpu.matmul %205, %206, %cst_54 {dimension_numbers = #tpu.dot_dimension_numbers<[1], [0], [0], [1], [0, 0, 1, 1], [], []>} : vector<8x32xf32>, vector<32x1xf32>, vector<8x1xf32> -> vector<8x1xf32>
      %c0_55 = arith.constant 0 : index
      %c0_56 = arith.constant 0 : index
      %208 = vector.load %arg6[%c0_55, %c0_56] : memref<1x1xf32, #tpu.memory_space<vmem>>, vector<1x1xf32>
      %209 = vector.broadcast %208 : vector<1x1xf32> to vector<8x1xf32>
      %210 = arith.addf %207, %209 : vector<8x1xf32>
      %211 = arith.negf %210 : vector<8x1xf32>
      %212 = math.exp %211 : vector<8x1xf32>
      %cst_57 = arith.constant 1.000000e+00 : f32
      %213 = vector.broadcast %cst_57 : f32 to vector<8x1xf32>
      %214 = arith.addf %213, %212 : vector<8x1xf32>
      %215 = arith.divf %213, %214 : vector<8x1xf32>
      %c0_58 = arith.constant 0 : index
      %c0_59 = arith.constant 0 : index
      %216 = vector.load %arg7[%c0_58, %c0_59] : memref<8x1xf32, #tpu.memory_space<vmem>>, vector<8x1xf32>
      tpu.vector_store %arg7[%c0_58, %c0_59], %215 {strides = array<i32>} : memref<8x1xf32, #tpu.memory_space<vmem>>, vector<8x1xf32>,
    } else {
    }
    return
  }
  func.func @transform_0(%arg0: i32) -> (i32, i32) {
    %c0_i32 = arith.constant 0 : i32
    %c0_i32_0 = arith.constant 0 : i32
    %c0_i32_1 = arith.constant 0 : i32
    return %c0_i32, %c0_i32_0 : i32, i32
  }
  func.func @transform_1(%arg0: i32) -> (i32, i32, i32) {
    %c0_i32 = arith.constant 0 : i32
    %c0_i32_0 = arith.constant 0 : i32
    %c0_i32_1 = arith.constant 0 : i32
    return %arg0, %c0_i32, %c0_i32_0 : i32, i32, i32
  }
  func.func @transform_2(%arg0: i32) -> (i32, i32, i32) {
    %c0_i32 = arith.constant 0 : i32
    %c0_i32_0 = arith.constant 0 : i32
    %c0_i32_1 = arith.constant 0 : i32
    return %arg0, %c0_i32, %c0_i32_0 : i32, i32, i32
  }
  func.func @transform_3(%arg0: i32) -> (i32, i32, i32) {
    %c0_i32 = arith.constant 0 : i32
    %c0_i32_0 = arith.constant 0 : i32
    %c0_i32_1 = arith.constant 0 : i32
    return %arg0, %c0_i32, %c0_i32_0 : i32, i32, i32
  }
  func.func @transform_4(%arg0: i32) -> (i32, i32) {
    %c0_i32 = arith.constant 0 : i32
    %c0_i32_0 = arith.constant 0 : i32
    %c0_i32_1 = arith.constant 0 : i32
    return %c0_i32, %c0_i32_0 : i32, i32
  }
  func.func @transform_5(%arg0: i32) -> (i32, i32) {
    %c0_i32 = arith.constant 0 : i32
    %c0_i32_0 = arith.constant 0 : i32
    %c0_i32_1 = arith.constant 0 : i32
    return %c0_i32, %c0_i32_0 : i32, i32
  }
  func.func @transform_6(%arg0: i32) -> (i32, i32) {
    %c0_i32 = arith.constant 0 : i32
    %c0_i32_0 = arith.constant 0 : i32
    %c0_i32_1 = arith.constant 0 : i32
    return %c0_i32, %c0_i32_0 : i32, i32
  }
}

</mosaic_0001>

<llo_original>
// kernel: network_forward.1
$region0: #{network_forward.1}
  #allocation0 [shape = 'u32[]', space=smem, size = 0x4, offset = 0x4, fixed_abs, tag = 'smem constant byte address 0x4 - core index']
  #allocation1 [shape = 'u32[72,128]{1,0:T(1,128)}', space=vmem, size = 0x9000, scoped, tag = 'internal scratch']
  #allocation2 [shape = 'f32[8,32]{1,0:T(8,128)}', space=vmem, size = 0x1000, scoped, tag = 'scratch operand']
  #allocation3 [shape = 'f32[8,128]{1,0:T(8,128)}', space=vmem, size = 0x1000, scoped, tag = 'scratch operand']
  #allocation4 [shape = 'f32[1,1]{1,0:T(1,128)S(1)}', space=vmem, size = 0x200, scoped, tag = 'scoped memory for network_forward.1']
  %s0 = inlined_call_operand.vmem [shape: f32[8,32], index: 0, kind: input, shape index: {}]
  %s1 = inlined_call_operand.vmem [shape: bf16[8,32,128], index: 1, kind: input, shape index: {}]
  %s2 = inlined_call_operand.vmem [shape: bf16[8,32,128], index: 2, kind: input, shape index: {}]
  %s3 = inlined_call_operand.vmem [shape: bf16[8,1,128], index: 3, kind: input, shape index: {}]
  %s4 = inlined_call_operand.vmem [shape: f32[32,1], index: 4, kind: input, shape index: {}]
  %s5 = inlined_call_operand.<no memory space> [shape: f32[1,1], index: 5, kind: input, shape index: {}]
  %s6 = inlined_call_operand.vmem [shape: f32[8,1], index: 6, kind: output, shape index: {}]
  %s7 = sld [smem:[#allocation0]]
  $region65: #{network_forward.1} parent=0
    _
  %s9 = ssub.s32 1, %s7
  %s10 = scalar_select 0, %s9, %s7
  %v11 = vstv %s5
  %12 = vst [vmem:[#allocation4] sm:$0x1] %v11
  loop: start=0, step=1, limit=10
  $region2: #{network_forward.1} parent=0 // loop_pre_header
    _
  $region3: #{network_forward.1} parent=0 // loop_header
    %s14 = sphi 0, %s18
    %p15 = scmp.ge.s32.totalorder %s14, 10
    %s22 = sphi 0, %s22
    %s24 = sphi 0, %s22
    %s25 = sphi 0, %s24
    %s39 = sphi 0, %s25
    %s45 = sphi 0, %s47
    %s48 = sphi 0, %s45
    %s49 = sphi 0, %s48
    %s65 = sphi 0, %s49
    %s71 = sphi 0, %s73
    %s74 = sphi 0, %s71
    %s75 = sphi 0, %s74
    %s91 = sphi 0, %s75
    %s97 = sphi 0, %s99
    %s100 = sphi 0, %s97
    %s101 = sphi 0, %s100
    %s117 = sphi 0, %s101
    %s121 = sphi 0, %s121
    %s123 = sphi 0, %s121
    %s124 = sphi 0, %s123
    %s138 = sphi 0, %s124
    %s142 = sphi 0, %s142
    %s144 = sphi 0, %s142
    %s145 = sphi 0, %s144
    %s159 = sphi 0, %s145
    %s163 = sphi 0, %s163
    %s165 = sphi 0, %s163
    %s166 = sphi 0, %s165
    %s180 = sphi 0, %s166
  $region4: #{network_forward.1} parent=0 // loop_header_branch
    %17 = sbr.rel (%p15) target = $region8
  $region5: #{network_forward.1} parent=0 // loop_body
    %s19 = ssub.s32 %s14, 1
    %s20 = ssub.s32 %s14, 2
    %s21 = sadd.s32 %s14, 1
    %s23 = sadd.s32 %s22, 1
    %p26 = scmp.eq.s32.totalorder %s14, 7
    %p27 = scmp.ne.s32.totalorder %s22, %s24
    %p28 = scmp.eq.s32.totalorder %s14, 0
    %p29 = por %p27, %p28
    %p30 = scmp.ne.s32.totalorder %s22, %s24
    %p31 = scmp.eq.s32.totalorder %s19, 7
    %p32 = por %p30, %p31
    %p33 = scmp.ne.s32.totalorder %s24, %s25
    %p34 = scmp.eq.s32.totalorder %s19, 0
    %p35 = por %p33, %p34
    %p36 = scmp.ne.s32.totalorder %s24, %s25
    %p37 = scmp.eq.s32.totalorder %s20, 7
    %p38 = por %p36, %p37
    %p40 = scmp.ne.s32.totalorder %s25, %s39
    %p41 = scmp.eq.s32.totalorder %s20, 0
    %p42 = por %p40, %p41
    %s43 = ssub.s32 %s14, %s21
    %p44 = scmp.eq.s32.totalorder %s43, 0
    %s46 = sadd.s32 %s45, 1
    %s47 = scalar_select %p44, %s45, %s46
    %p50 = pneg %p44
    %p51 = scmp.eq.s32.totalorder %s14, 7
    %p52 = por %p50, %p51
    %p53 = scmp.ne.s32.totalorder %s45, %s48
    %p54 = scmp.eq.s32.totalorder %s14, 0
    %p55 = por %p53, %p54
    %p56 = scmp.ne.s32.totalorder %s45, %s48
    %p57 = scmp.eq.s32.totalorder %s19, 7
    %p58 = por %p56, %p57
    %p59 = scmp.ne.s32.totalorder %s48, %s49
    %p60 = scmp.eq.s32.totalorder %s19, 0
    %p61 = por %p59, %p60
    %p62 = scmp.ne.s32.totalorder %s48, %s49
    %p63 = scmp.eq.s32.totalorder %s20, 7
    %p64 = por %p62, %p63
    %p66 = scmp.ne.s32.totalorder %s49, %s65
    %p67 = scmp.eq.s32.totalorder %s20, 0
    %p68 = por %p66, %p67
    %s69 = ssub.s32 %s14, %s21
    %p70 = scmp.eq.s32.totalorder %s69, 0
    %s72 = sadd.s32 %s71, 1
    %s73 = scalar_select %p70, %s71, %s72
    %p76 = pneg %p70
    %p77 = scmp.eq.s32.totalorder %s14, 7
    %p78 = por %p76, %p77
    %p79 = scmp.ne.s32.totalorder %s71, %s74
    %p80 = scmp.eq.s32.totalorder %s14, 0
    %p81 = por %p79, %p80
    %p82 = scmp.ne.s32.totalorder %s71, %s74
    %p83 = scmp.eq.s32.totalorder %s19, 7
    %p84 = por %p82, %p83
    %p85 = scmp.ne.s32.totalorder %s74, %s75
    %p86 = scmp.eq.s32.totalorder %s19, 0
    %p87 = por %p85, %p86
    %p88 = scmp.ne.s32.totalorder %s74, %s75
    %p89 = scmp.eq.s32.totalorder %s20, 7
    %p90 = por %p88, %p89
    %p92 = scmp.ne.s32.totalorder %s75, %s91
    %p93 = scmp.eq.s32.totalorder %s20, 0
    %p94 = por %p92, %p93
    %s95 = ssub.s32 %s14, %s21
    %p96 = scmp.eq.s32.totalorder %s95, 0
    %s98 = sadd.s32 %s97, 1
    %s99 = scalar_select %p96, %s97, %s98
    %p102 = pneg %p96
    %p103 = scmp.eq.s32.totalorder %s14, 7
    %p104 = por %p102, %p103
    %p105 = scmp.ne.s32.totalorder %s97, %s100
    %p106 = scmp.eq.s32.totalorder %s14, 0
    %p107 = por %p105, %p106
    %p108 = scmp.ne.s32.totalorder %s97, %s100
    %p109 = scmp.eq.s32.totalorder %s19, 7
    %p110 = por %p108, %p109
    %p111 = scmp.ne.s32.totalorder %s100, %s101
    %p112 = scmp.eq.s32.totalorder %s19, 0
    %p113 = por %p111, %p112
    %p114 = scmp.ne.s32.totalorder %s100, %s101
    %p115 = scmp.eq.s32.totalorder %s20, 7
    %p116 = por %p114, %p115
    %p118 = scmp.ne.s32.totalorder %s101, %s117
    %p119 = scmp.eq.s32.totalorder %s20, 0
    %p120 = por %p118, %p119
    %s122 = sadd.s32 %s121, 1
    %p125 = scmp.eq.s32.totalorder %s14, 7
    %p126 = scmp.ne.s32.totalorder %s121, %s123
    %p127 = scmp.eq.s32.totalorder %s14, 0
    %p128 = por %p126, %p127
    %p129 = scmp.ne.s32.totalorder %s121, %s123
    %p130 = scmp.eq.s32.totalorder %s19, 7
    %p131 = por %p129, %p130
    %p132 = scmp.ne.s32.totalorder %s123, %s124
    %p133 = scmp.eq.s32.totalorder %s19, 0
    %p134 = por %p132, %p133
    %p135 = scmp.ne.s32.totalorder %s123, %s124
    %p136 = scmp.eq.s32.totalorder %s20, 7
    %p137 = por %p135, %p136
    %p139 = scmp.ne.s32.totalorder %s124, %s138
    %p140 = scmp.eq.s32.totalorder %s20, 0
    %p141 = por %p139, %p140
    %s143 = sadd.s32 %s142, 1
    %p146 = scmp.eq.s32.totalorder %s14, 7
    %p147 = scmp.ne.s32.totalorder %s142, %s144
    %p148 = scmp.eq.s32.totalorder %s14, 0
    %p149 = por %p147, %p148
    %p150 = scmp.ne.s32.totalorder %s142, %s144
    %p151 = scmp.eq.s32.totalorder %s19, 7
    %p152 = por %p150, %p151
    %p153 = scmp.ne.s32.totalorder %s144, %s145
    %p154 = scmp.eq.s32.totalorder %s19, 0
    %p155 = por %p153, %p154
    %p156 = scmp.ne.s32.totalorder %s144, %s145
    %p157 = scmp.eq.s32.totalorder %s20, 7
    %p158 = por %p156, %p157
    %p160 = scmp.ne.s32.totalorder %s145, %s159
    %p161 = scmp.eq.s32.totalorder %s20, 0
    %p162 = por %p160, %p161
    %s164 = sadd.s32 %s163, 1
    %p167 = scmp.eq.s32.totalorder %s14, 7
    %p168 = scmp.ne.s32.totalorder %s163, %s165
    %p169 = scmp.eq.s32.totalorder %s14, 0
    %p170 = por %p168, %p169
    %p171 = scmp.ne.s32.totalorder %s163, %s165
    %p172 = scmp.eq.s32.totalorder %s19, 7
    %p173 = por %p171, %p172
    %p174 = scmp.ne.s32.totalorder %s165, %s166
    %p175 = scmp.eq.s32.totalorder %s19, 0
    %p176 = por %p174, %p175
    %p177 = scmp.ne.s32.totalorder %s165, %s166
    %p178 = scmp.eq.s32.totalorder %s20, 7
    %p179 = por %p177, %p178
    %p181 = scmp.ne.s32.totalorder %s166, %s180
    %p182 = scmp.eq.s32.totalorder %s20, 0
    %p183 = por %p181, %p182
    %p184 = scmp.le.s32.totalorder 1, %s14
    %p185 = scmp.lt.s32.totalorder %s14, 9
    %p186 = pnand %p184, %p185
    %p187 = pneg %p186
    // Predicated region
    $region9: #{network_forward.1} parent=5 // pred_check
      _
    $region10: #{network_forward.1} parent=5 // pred_check_branch
      %189 = sbr.rel (%p186) target = $region12
    $region11: #{network_forward.1} parent=5 // pred_region
      %s190 = ssub.s32 %s14, 1
      // Predicated region
      $region13: #{network_forward.1} parent=11 // pred_check
        %p191 = pneg %p35
      $region14: #{network_forward.1} parent=11 // pred_check_branch
        %193 = sbr.rel (%p191) target = $region16
      $region15: #{network_forward.1} parent=11 // pred_region
        _
      $region16: #{network_forward.1} parent=11 // pred_fallthru
        _
      // Predicated region
      $region17: #{network_forward.1} parent=11 // pred_check
        %p194 = pneg %p134
      $region18: #{network_forward.1} parent=11 // pred_check_branch
        %196 = sbr.rel (%p194) target = $region20
      $region19: #{network_forward.1} parent=11 // pred_region
        _
      $region20: #{network_forward.1} parent=11 // pred_fallthru
        _
      // Predicated region
      $region21: #{network_forward.1} parent=11 // pred_check
        %p197 = pneg %p155
      $region22: #{network_forward.1} parent=11 // pred_check_branch
        %199 = sbr.rel (%p197) target = $region24
      $region23: #{network_forward.1} parent=11 // pred_region
        _
      $region24: #{network_forward.1} parent=11 // pred_fallthru
        _
    $region12: #{network_forward.1} parent=5 // pred_fallthru
      _
    %p200 = scmp.lt.s32.totalorder %s14, 8
    // Predicated region
    $region25: #{network_forward.1} parent=5 // pred_check
      %p201 = pneg %p200
    $region26: #{network_forward.1} parent=5 // pred_check_branch
      %203 = sbr.rel (%p201) target = $region28
    $region27: #{network_forward.1} parent=5 // pred_region
      // Predicated region
      $region29: #{network_forward.1} parent=27 // pred_check
        %p204 = pneg %p55
      $region30: #{network_forward.1} parent=27 // pred_check_branch
        %206 = sbr.rel (%p204) target = $region32
      $region31: #{network_forward.1} parent=27 // pred_region
        %p207 = scmp.lt.s32.totalorder %s14, 7
        %s208 = scalar_select %p207, %s14, 7
        %s209 = smul.addr %s208, 4
        %s210 = smul.addr %s209, 4
        %s211 = scalar_lea.vmem %s1, %s210
      $region32: #{network_forward.1} parent=27 // pred_fallthru
        _
      // Predicated region
      $region33: #{network_forward.1} parent=27 // pred_check
        %p212 = pneg %p81
      $region34: #{network_forward.1} parent=27 // pred_check_branch
        %214 = sbr.rel (%p212) target = $region36
      $region35: #{network_forward.1} parent=27 // pred_region
        %p215 = scmp.lt.s32.totalorder %s14, 7
        %s216 = scalar_select %p215, %s14, 7
        %s217 = smul.addr %s216, 4
        %s218 = smul.addr %s217, 4
        %s219 = scalar_lea.vmem %s2, %s218
      $region36: #{network_forward.1} parent=27 // pred_fallthru
        _
      // Predicated region
      $region37: #{network_forward.1} parent=27 // pred_check
        %p220 = pneg %p107
      $region38: #{network_forward.1} parent=27 // pred_check_branch
        %222 = sbr.rel (%p220) target = $region40
      $region39: #{network_forward.1} parent=27 // pred_region
        %p223 = scmp.lt.s32.totalorder %s14, 7
        %s224 = scalar_select %p223, %s14, 7
        %s225 = scalar_lea.vmem %s3, %s224
      $region40: #{network_forward.1} parent=27 // pred_fallthru
        _
    $region28: #{network_forward.1} parent=5 // pred_fallthru
      _
    %p226 = scmp.le.s32.totalorder 1, %s14
    %p227 = scmp.lt.s32.totalorder %s14, 9
    %p228 = pnand %p226, %p227
    %p229 = pneg %p228
    // Predicated region
    $region41: #{network_forward.1} parent=5 // pred_check
      _
    $region42: #{network_forward.1} parent=5 // pred_check_branch
      %231 = sbr.rel (%p228) target = $region44
    $region43: #{network_forward.1} parent=5 // pred_region
      %s232 = ssub.s32 %s14, 1
      %p233 = pneg %p35
      %p234 = pneg %p32
      %p235 = scmp.lt.s32.totalorder %s19, 7
      %s236 = scalar_select %p235, %s19, 7
      %s237 = smul.addr %s236, 4
      %s238 = smul.addr %s237, 4
      %s239 = scalar_lea.vmem %s1, %s238
      %p240 = pneg %p61
      %p241 = pneg %p58
      %p242 = scmp.lt.s32.totalorder %s19, 7
      %s243 = scalar_select %p242, %s19, 7
      %s244 = smul.addr %s243, 4
      %s245 = smul.addr %s244, 4
      %s246 = scalar_lea.vmem %s2, %s245
      %p247 = pneg %p87
      %p248 = pneg %p84
      %p249 = scmp.lt.s32.totalorder %s19, 7
      %s250 = scalar_select %p249, %s19, 7
      %s251 = scalar_lea.vmem %s3, %s250
      %p252 = pneg %p113
      %p253 = pneg %p110
      %p254 = pneg %p134
      %p255 = pneg %p131
      %p256 = pneg %p155
      %p257 = pneg %p152
      %p258 = pneg %p176
      %p259 = pneg %p173
      %p260 = scmp.lt.s32.totalorder %s19, 7
      %s261 = scalar_select %p260, %s19, 7
      %s262 = smul.addr %s261, 4
      %s263 = smul.addr %s262, 4
      %s264 = scalar_lea.vmem %s1, %s263
      %p265 = scmp.lt.s32.totalorder %s19, 7
      %s266 = scalar_select %p265, %s19, 7
      %s267 = smul.addr %s266, 4
      %s268 = smul.addr %s267, 4
      %s269 = scalar_lea.vmem %s2, %s268
      %p270 = scmp.lt.s32.totalorder %s19, 7
      %s271 = scalar_select %p270, %s19, 7
      %s272 = scalar_lea.vmem %s3, %s271
      %p274 = scmp.eq.s32.totalorder %s19, 0
      // Predicated region
      $region45: #{network_forward.1} parent=43 // pred_check
        %p275 = pneg %p274
      $region46: #{network_forward.1} parent=43 // pred_check_branch
        %277 = sbr.rel (%p275) target = $region48
      $region47: #{network_forward.1} parent=43 // pred_region
        %v278 = vld [vmem:[%s0] sm:$0xff]
        %vm279 = vcmask 261120
        %280 = vst.msk [vmem:[#allocation2] sm:$0xff] %vm279, %v278
      $region48: #{network_forward.1} parent=43 // pred_fallthru
        _
      %v281 = vld [vmem:[#allocation2] sm:$0xff]
      %v282 = vpack.c.bf16 %v281, %v281
      %v283 = vld [vmem:[%s264] sm:$0xf]
      %v284 = vld [vmem:[%s264 + $0x4] sm:$0xf]
      %v285 = vld [vmem:[%s264 + $0x8] sm:$0xf]
      %v286 = vld [vmem:[%s264 + $0xc] sm:$0xf]
      %v287 = vld [vmem:[%s272] sm:$0x1]
      %v288 = vunpack.c.l.bf16 %v287
      %v289 = vperm.slane %v288, 0
      %v294 = vunpack.c.l.b16 %v283
      %v295 = vunpack.c.l.b16 %v284
      %v296 = vunpack.c.l.b16 %v285
      %v297 = vunpack.c.l.b16 %v286
      %v298 = vpack.c.b16 %v295, %v294
      %v299 = vpack.c.b16 %v297, %v296
      %vm302 = vcmask 261120
      %v304 = vsel %vm302, %v282, 0
      %306 = vmatpush.bf16.msra.mxu0 0
      %307 = vmatpush.bf16.msra.mxu0 0
      %308 = vmatpush.bf16.msra.mxu0 0
      %309 = vmatpush.bf16.msra.mxu0 0
      %310 = vmatpush.bf16.msra.mxu0 0
      %311 = vmatpush.bf16.msra.mxu0 0
      %312 = vmatpush.bf16.msra.mxu0 %v299
      %313 = vmatpush.bf16.msra.mxu0 %v298
      %314 = vmatmul.bf16.gmra.mxu0 %v304
      %v315 = vpop.f32.mrf.mxu0
      %v316 = vadd.f32 %v289, %v315
      %v317 = vpop.f32.mrf.mxu0
      %318 = vdwg.mxu0
      %319 = vst [vmem:[#allocation3] sm:$0xff] %v316
      %v320 = vld [vmem:[%s269] sm:$0xf]
      %v321 = vld [vmem:[%s269 + $0x4] sm:$0xf]
      %v322 = vld [vmem:[%s269 + $0x8] sm:$0xf]
      %v323 = vld [vmem:[%s269 + $0xc] sm:$0xf]
      %v324 = vld [vmem:[#allocation3] sm:$0x1]
      %v329 = vunpack.c.l.b16 %v320
      %v330 = vunpack.c.l.b16 %v321
      %v331 = vunpack.c.l.b16 %v322
      %v332 = vunpack.c.l.b16 %v323
      %v333 = vpack.c.b16 %v330, %v329
      %v334 = vpack.c.b16 %v332, %v331
      %v338 = vsel %vm302, 0, 0
      %340 = vmatpush.bf16.msra.mxu0 0
      %341 = vmatpush.bf16.msra.mxu0 0
      %342 = vmatpush.bf16.msra.mxu0 0
      %343 = vmatpush.bf16.msra.mxu0 0
      %344 = vmatpush.bf16.msra.mxu0 0
      %345 = vmatpush.bf16.msra.mxu0 0
      %346 = vmatpush.bf16.msra.mxu0 %v334
      %347 = vmatpush.bf16.msra.mxu0 %v333
      %348 = vmatmul.bf16.gmra.mxu0 %v338
      %v349 = vpop.f32.mrf.mxu0
      %v350 = vadd.f32 0.0, %v349
      %v351 = vpop.f32.mrf.mxu0
      %352 = vdwg.mxu0
      %v353 = vadd.f32 %v324, %v350
      %v354 = vxor.u32 %v353, 2147483648
      %v355 = vmul.f32 %v354, 1.442695
      %v356 = vpow.pop %v355
      %v357 = vadd.f32 %v356, 1.0
      %v358 = vrcp.pop %v357
      %v359 = vmul.f32 %v357, %v358
      %v360 = vsub.f32 1.0, %v359
      %v361 = vmul.f32 %v358, %v360
      %v362 = vadd.f32 %v358, %v361
      %vm363 = vweird.f32 %v357
      %vm364 = vweird.f32 %v358
      %vm365 = vmor %vm363, %vm364
      %v366 = vsel %vm365, %v358, %v362
      %v367 = vand.u32 2147483647, %v357
      %vm368 = vcmp.eq.f32.partialorder %v367, 8.507059e+37
      %v369 = vand.u32 %v357, 2147483648
      %v370 = vor.u32 1.1754944e-38, %v369
      %v371 = vsel %vm368, %v370, %v366
      %v372 = vmul.f32 1.0, %v371
      %v373 = vtanh.pop %v353
      %v374 = vmul.f32 %v372, 0.0
      %376 = vrot.lane.b32.xlu0 %v373, 32
      %v377 = vpop.permute.xlu0 %376
      %v379 = vmul.f32 %v372, %v377
      %381 = vrot.lane.b32.xlu0 %v379, 32
      %v382 = vpop.permute.xlu0 %381
      %v384 = vadd.f32 %v374, %v382
      %v385 = vtanh.pop %v384
      %387 = vrot.lane.b32.xlu0 %v385, 32
      %v388 = vpop.permute.xlu0 %387
      %v390 = vmul.f32 %v372, %v388
      %392 = vrot.lane.b32.xlu0 %v390, 64
      %v393 = vpop.permute.xlu0 %392
      %vm395 = vcmask 253952
      %396 = vst.msk [vmem:[#allocation2] sm:$0x1] %vm395, %v393
      %v397 = vld [vmem:[#allocation3 + $0x1] sm:$0x1]
      %v398 = vpack.c.bf16 %v390, %v390
      %400 = vrot.lane.b32.xlu0 %v398, 64
      %v401 = vpop.permute.xlu0 %400
      %v403 = vsel %vm302, %v401, 0
      %405 = vmatpush.bf16.msra.mxu0 0
      %406 = vmatpush.bf16.msra.mxu0 0
      %407 = vmatpush.bf16.msra.mxu0 0
      %408 = vmatpush.bf16.msra.mxu0 0
      %409 = vmatpush.bf16.msra.mxu0 0
      %410 = vmatpush.bf16.msra.mxu0 0
      %411 = vmatpush.bf16.msra.mxu0 %v334
      %412 = vmatpush.bf16.msra.mxu0 %v333
      %413 = vmatmul.bf16.gmra.mxu0 %v403
      %v414 = vpop.f32.mrf.mxu0
      %v415 = vadd.f32 0.0, %v414
      %v416 = vpop.f32.mrf.mxu0
      %417 = vdwg.mxu0
      %v418 = vadd.f32 %v397, %v415
      %v419 = vxor.u32 %v418, 2147483648
      %v420 = vmul.f32 %v419, 1.442695
      %v421 = vpow.pop %v420
      %v422 = vadd.f32 %v421, 1.0
      %v423 = vrcp.pop %v422
      %v424 = vmul.f32 %v422, %v423
      %v425 = vsub.f32 1.0, %v424
      %v426 = vmul.f32 %v423, %v425
      %v427 = vadd.f32 %v423, %v426
      %vm428 = vweird.f32 %v422
      %vm429 = vweird.f32 %v423
      %vm430 = vmor %vm428, %vm429
      %v431 = vsel %vm430, %v423, %v427
      %v432 = vand.u32 2147483647, %v422
      %vm433 = vcmp.eq.f32.partialorder %v432, 8.507059e+37
      %v434 = vand.u32 %v422, 2147483648
      %v435 = vor.u32 1.1754944e-38, %v434
      %v436 = vsel %vm433, %v435, %v431
      %v437 = vmul.f32 1.0, %v436
      %v438 = vtanh.pop %v418
      %v439 = vmul.f32 %v437, %v384
      %441 = vrot.lane.b32.xlu0 %v438, 32
      %v442 = vpop.permute.xlu0 %441
      %v444 = vmul.f32 %v437, %v442
      %446 = vrot.lane.b32.xlu0 %v444, 32
      %v447 = vpop.permute.xlu0 %446
      %v449 = vadd.f32 %v439, %v447
      %v450 = vtanh.pop %v449
      %452 = vrot.lane.b32.xlu0 %v450, 32
      %v453 = vpop.permute.xlu0 %452
      %v455 = vmul.f32 %v437, %v453
      %457 = vrot.lane.b32.xlu0 %v455, 64
      %v458 = vpop.permute.xlu0 %457
      %460 = vst.msk [vmem:[#allocation2 + $0x1] sm:$0x1] %vm395, %v458
      %v461 = vld [vmem:[#allocation3 + $0x2] sm:$0x1]
      %v462 = vpack.c.bf16 %v455, %v455
      %464 = vrot.lane.b32.xlu0 %v462, 64
      %v465 = vpop.permute.xlu0 %464
      %v467 = vsel %vm302, %v465, 0
      %469 = vmatpush.bf16.msra.mxu0 0
      %470 = vmatpush.bf16.msra.mxu0 0
      %471 = vmatpush.bf16.msra.mxu0 0
      %472 = vmatpush.bf16.msra.mxu0 0
      %473 = vmatpush.bf16.msra.mxu0 0
      %474 = vmatpush.bf16.msra.mxu0 0
      %475 = vmatpush.bf16.msra.mxu0 %v334
      %476 = vmatpush.bf16.msra.mxu0 %v333
      %477 = vmatmul.bf16.gmra.mxu0 %v467
      %v478 = vpop.f32.mrf.mxu0
      %v479 = vadd.f32 0.0, %v478
      %v480 = vpop.f32.mrf.mxu0
      %481 = vdwg.mxu0
      %v482 = vadd.f32 %v461, %v479
      %v483 = vxor.u32 %v482, 2147483648
      %v484 = vmul.f32 %v483, 1.442695
      %v485 = vpow.pop %v484
      %v486 = vadd.f32 %v485, 1.0
      %v487 = vrcp.pop %v486
      %v488 = vmul.f32 %v486, %v487
      %v489 = vsub.f32 1.0, %v488
      %v490 = vmul.f32 %v487, %v489
      %v491 = vadd.f32 %v487, %v490
      %vm492 = vweird.f32 %v486
      %vm493 = vweird.f32 %v487
      %vm494 = vmor %vm492, %vm493
      %v495 = vsel %vm494, %v487, %v491
      %v496 = vand.u32 2147483647, %v486
      %vm497 = vcmp.eq.f32.partialorder %v496, 8.507059e+37
      %v498 = vand.u32 %v486, 2147483648
      %v499 = vor.u32 1.1754944e-38, %v498
      %v500 = vsel %vm497, %v499, %v495
      %v501 = vmul.f32 1.0, %v500
      %v502 = vtanh.pop %v482
      %v503 = vmul.f32 %v501, %v449
      %505 = vrot.lane.b32.xlu0 %v502, 32
      %v506 = vpop.permute.xlu0 %505
      %v508 = vmul.f32 %v501, %v506
      %510 = vrot.lane.b32.xlu0 %v508, 32
      %v511 = vpop.permute.xlu0 %510
      %v513 = vadd.f32 %v503, %v511
      %v514 = vtanh.pop %v513
      %516 = vrot.lane.b32.xlu0 %v514, 32
      %v517 = vpop.permute.xlu0 %516
      %v519 = vmul.f32 %v501, %v517
      %521 = vrot.lane.b32.xlu0 %v519, 64
      %v522 = vpop.permute.xlu0 %521
      %524 = vst.msk [vmem:[#allocation2 + $0x2] sm:$0x1] %vm395, %v522
      %v525 = vld [vmem:[#allocation3 + $0x3] sm:$0x1]
      %v526 = vpack.c.bf16 %v519, %v519
      %528 = vrot.lane.b32.xlu0 %v526, 64
      %v529 = vpop.permute.xlu0 %528
      %v531 = vsel %vm302, %v529, 0
      %533 = vmatpush.bf16.msra.mxu0 0
      %534 = vmatpush.bf16.msra.mxu0 0
      %535 = vmatpush.bf16.msra.mxu0 0
      %536 = vmatpush.bf16.msra.mxu0 0
      %537 = vmatpush.bf16.msra.mxu0 0
      %538 = vmatpush.bf16.msra.mxu0 0
      %539 = vmatpush.bf16.msra.mxu0 %v334
      %540 = vmatpush.bf16.msra.mxu0 %v333
      %541 = vmatmul.bf16.gmra.mxu0 %v531
      %v542 = vpop.f32.mrf.mxu0
      %v543 = vadd.f32 0.0, %v542
      %v544 = vpop.f32.mrf.mxu0
      %545 = vdwg.mxu0
      %v546 = vadd.f32 %v525, %v543
      %v547 = vxor.u32 %v546, 2147483648
      %v548 = vmul.f32 %v547, 1.442695
      %v549 = vpow.pop %v548
      %v550 = vadd.f32 %v549, 1.0
      %v551 = vrcp.pop %v550
      %v552 = vmul.f32 %v550, %v551
      %v553 = vsub.f32 1.0, %v552
      %v554 = vmul.f32 %v551, %v553
      %v555 = vadd.f32 %v551, %v554
      %vm556 = vweird.f32 %v550
      %vm557 = vweird.f32 %v551
      %vm558 = vmor %vm556, %vm557
      %v559 = vsel %vm558, %v551, %v555
      %v560 = vand.u32 2147483647, %v550
      %vm561 = vcmp.eq.f32.partialorder %v560, 8.507059e+37
      %v562 = vand.u32 %v550, 2147483648
      %v563 = vor.u32 1.1754944e-38, %v562
      %v564 = vsel %vm561, %v563, %v559
      %v565 = vmul.f32 1.0, %v564
      %v566 = vtanh.pop %v546
      %v567 = vmul.f32 %v565, %v513
      %569 = vrot.lane.b32.xlu0 %v566, 32
      %v570 = vpop.permute.xlu0 %569
      %v572 = vmul.f32 %v565, %v570
      %574 = vrot.lane.b32.xlu0 %v572, 32
      %v575 = vpop.permute.xlu0 %574
      %v577 = vadd.f32 %v567, %v575
      %v578 = vtanh.pop %v577
      %580 = vrot.lane.b32.xlu0 %v578, 32
      %v581 = vpop.permute.xlu0 %580
      %v583 = vmul.f32 %v565, %v581
      %585 = vrot.lane.b32.xlu0 %v583, 64
      %v586 = vpop.permute.xlu0 %585
      %588 = vst.msk [vmem:[#allocation2 + $0x3] sm:$0x1] %vm395, %v586
      %v589 = vld [vmem:[#allocation3 + $0x4] sm:$0x1]
      %v590 = vpack.c.bf16 %v583, %v583
      %592 = vrot.lane.b32.xlu0 %v590, 64
      %v593 = vpop.permute.xlu0 %592
      %v595 = vsel %vm302, %v593, 0
      %597 = vmatpush.bf16.msra.mxu0 0
      %598 = vmatpush.bf16.msra.mxu0 0
      %599 = vmatpush.bf16.msra.mxu0 0
      %600 = vmatpush.bf16.msra.mxu0 0
      %601 = vmatpush.bf16.msra.mxu0 0
      %602 = vmatpush.bf16.msra.mxu0 0
      %603 = vmatpush.bf16.msra.mxu0 %v334
      %604 = vmatpush.bf16.msra.mxu0 %v333
      %605 = vmatmul.bf16.gmra.mxu0 %v595
      %v606 = vpop.f32.mrf.mxu0
      %v607 = vadd.f32 0.0, %v606
      %v608 = vpop.f32.mrf.mxu0
      %609 = vdwg.mxu0
      %v610 = vadd.f32 %v589, %v607
      %v611 = vxor.u32 %v610, 2147483648
      %v612 = vmul.f32 %v611, 1.442695
      %v613 = vpow.pop %v612
      %v614 = vadd.f32 %v613, 1.0
      %v615 = vrcp.pop %v614
      %v616 = vmul.f32 %v614, %v615
      %v617 = vsub.f32 1.0, %v616
      %v618 = vmul.f32 %v615, %v617
      %v619 = vadd.f32 %v615, %v618
      %vm620 = vweird.f32 %v614
      %vm621 = vweird.f32 %v615
      %vm622 = vmor %vm620, %vm621
      %v623 = vsel %vm622, %v615, %v619
      %v624 = vand.u32 2147483647, %v614
      %vm625 = vcmp.eq.f32.partialorder %v624, 8.507059e+37
      %v626 = vand.u32 %v614, 2147483648
      %v627 = vor.u32 1.1754944e-38, %v626
      %v628 = vsel %vm625, %v627, %v623
      %v629 = vmul.f32 1.0, %v628
      %v630 = vtanh.pop %v610
      %v631 = vmul.f32 %v629, %v577
      %633 = vrot.lane.b32.xlu0 %v630, 32
      %v634 = vpop.permute.xlu0 %633
      %v636 = vmul.f32 %v629, %v634
      %638 = vrot.lane.b32.xlu0 %v636, 32
      %v639 = vpop.permute.xlu0 %638
      %v641 = vadd.f32 %v631, %v639
      %v642 = vtanh.pop %v641
      %644 = vrot.lane.b32.xlu0 %v642, 32
      %v645 = vpop.permute.xlu0 %644
      %v647 = vmul.f32 %v629, %v645
      %649 = vrot.lane.b32.xlu0 %v647, 64
      %v650 = vpop.permute.xlu0 %649
      %652 = vst.msk [vmem:[#allocation2 + $0x4] sm:$0x1] %vm395, %v650
      %v653 = vld [vmem:[#allocation3 + $0x5] sm:$0x1]
      %v654 = vpack.c.bf16 %v647, %v647
      %656 = vrot.lane.b32.xlu0 %v654, 64
      %v657 = vpop.permute.xlu0 %656
      %v659 = vsel %vm302, %v657, 0
      %661 = vmatpush.bf16.msra.mxu0 0
      %662 = vmatpush.bf16.msra.mxu0 0
      %663 = vmatpush.bf16.msra.mxu0 0
      %664 = vmatpush.bf16.msra.mxu0 0
      %665 = vmatpush.bf16.msra.mxu0 0
      %666 = vmatpush.bf16.msra.mxu0 0
      %667 = vmatpush.bf16.msra.mxu0 %v334
      %668 = vmatpush.bf16.msra.mxu0 %v333
      %669 = vmatmul.bf16.gmra.mxu0 %v659
      %v670 = vpop.f32.mrf.mxu0
      %v671 = vadd.f32 0.0, %v670
      %v672 = vpop.f32.mrf.mxu0
      %673 = vdwg.mxu0
      %v674 = vadd.f32 %v653, %v671
      %v675 = vxor.u32 %v674, 2147483648
      %v676 = vmul.f32 %v675, 1.442695
      %v677 = vpow.pop %v676
      %v678 = vadd.f32 %v677, 1.0
      %v679 = vrcp.pop %v678
      %v680 = vmul.f32 %v678, %v679
      %v681 = vsub.f32 1.0, %v680
      %v682 = vmul.f32 %v679, %v681
      %v683 = vadd.f32 %v679, %v682
      %vm684 = vweird.f32 %v678
      %vm685 = vweird.f32 %v679
      %vm686 = vmor %vm684, %vm685
      %v687 = vsel %vm686, %v679, %v683
      %v688 = vand.u32 2147483647, %v678
      %vm689 = vcmp.eq.f32.partialorder %v688, 8.507059e+37
      %v690 = vand.u32 %v678, 2147483648
      %v691 = vor.u32 1.1754944e-38, %v690
      %v692 = vsel %vm689, %v691, %v687
      %v693 = vmul.f32 1.0, %v692
      %v694 = vtanh.pop %v674
      %v695 = vmul.f32 %v693, %v641
      %697 = vrot.lane.b32.xlu0 %v694, 32
      %v698 = vpop.permute.xlu0 %697
      %v700 = vmul.f32 %v693, %v698
      %702 = vrot.lane.b32.xlu0 %v700, 32
      %v703 = vpop.permute.xlu0 %702
      %v705 = vadd.f32 %v695, %v703
      %v706 = vtanh.pop %v705
      %708 = vrot.lane.b32.xlu0 %v706, 32
      %v709 = vpop.permute.xlu0 %708
      %v711 = vmul.f32 %v693, %v709
      %713 = vrot.lane.b32.xlu0 %v711, 64
      %v714 = vpop.permute.xlu0 %713
      %716 = vst.msk [vmem:[#allocation2 + $0x5] sm:$0x1] %vm395, %v714
      %v717 = vld [vmem:[#allocation3 + $0x6] sm:$0x1]
      %v718 = vpack.c.bf16 %v711, %v711
      %720 = vrot.lane.b32.xlu0 %v718, 64
      %v721 = vpop.permute.xlu0 %720
      %v723 = vsel %vm302, %v721, 0
      %725 = vmatpush.bf16.msra.mxu0 0
      %726 = vmatpush.bf16.msra.mxu0 0
      %727 = vmatpush.bf16.msra.mxu0 0
      %728 = vmatpush.bf16.msra.mxu0 0
      %729 = vmatpush.bf16.msra.mxu0 0
      %730 = vmatpush.bf16.msra.mxu0 0
      %731 = vmatpush.bf16.msra.mxu0 %v334
      %732 = vmatpush.bf16.msra.mxu0 %v333
      %733 = vmatmul.bf16.gmra.mxu0 %v723
      %v734 = vpop.f32.mrf.mxu0
      %v735 = vadd.f32 0.0, %v734
      %v736 = vpop.f32.mrf.mxu0
      %737 = vdwg.mxu0
      %v738 = vadd.f32 %v717, %v735
      %v739 = vxor.u32 %v738, 2147483648
      %v740 = vmul.f32 %v739, 1.442695
      %v741 = vpow.pop %v740
      %v742 = vadd.f32 %v741, 1.0
      %v743 = vrcp.pop %v742
      %v744 = vmul.f32 %v742, %v743
      %v745 = vsub.f32 1.0, %v744
      %v746 = vmul.f32 %v743, %v745
      %v747 = vadd.f32 %v743, %v746
      %vm748 = vweird.f32 %v742
      %vm749 = vweird.f32 %v743
      %vm750 = vmor %vm748, %vm749
      %v751 = vsel %vm750, %v743, %v747
      %v752 = vand.u32 2147483647, %v742
      %vm753 = vcmp.eq.f32.partialorder %v752, 8.507059e+37
      %v754 = vand.u32 %v742, 2147483648
      %v755 = vor.u32 1.1754944e-38, %v754
      %v756 = vsel %vm753, %v755, %v751
      %v757 = vmul.f32 1.0, %v756
      %v758 = vtanh.pop %v738
      %v759 = vmul.f32 %v757, %v705
      %761 = vrot.lane.b32.xlu0 %v758, 32
      %v762 = vpop.permute.xlu0 %761
      %v764 = vmul.f32 %v757, %v762
      %766 = vrot.lane.b32.xlu0 %v764, 32
      %v767 = vpop.permute.xlu0 %766
      %v769 = vadd.f32 %v759, %v767
      %v770 = vtanh.pop %v769
      %772 = vrot.lane.b32.xlu0 %v770, 32
      %v773 = vpop.permute.xlu0 %772
      %v775 = vmul.f32 %v757, %v773
      %777 = vrot.lane.b32.xlu0 %v775, 64
      %v778 = vpop.permute.xlu0 %777
      %780 = vst.msk [vmem:[#allocation2 + $0x6] sm:$0x1] %vm395, %v778
      %v781 = vld [vmem:[#allocation3 + $0x7] sm:$0x1]
      %v782 = vpack.c.bf16 %v775, %v775
      %784 = vrot.lane.b32.xlu0 %v782, 64
      %v785 = vpop.permute.xlu0 %784
      %v787 = vsel %vm302, %v785, 0
      %789 = vmatpush.bf16.msra.mxu0 0
      %790 = vmatpush.bf16.msra.mxu0 0
      %791 = vmatpush.bf16.msra.mxu0 0
      %792 = vmatpush.bf16.msra.mxu0 0
      %793 = vmatpush.bf16.msra.mxu0 0
      %794 = vmatpush.bf16.msra.mxu0 0
      %795 = vmatpush.bf16.msra.mxu0 %v334
      %796 = vmatpush.bf16.msra.mxu0 %v333
      %797 = vmatmul.bf16.gmra.mxu0 %v787
      %v798 = vpop.f32.mrf.mxu0
      %v799 = vadd.f32 0.0, %v798
      %v800 = vpop.f32.mrf.mxu0
      %801 = vdwg.mxu0
      %v802 = vadd.f32 %v781, %v799
      %v803 = vxor.u32 %v802, 2147483648
      %v804 = vmul.f32 %v803, 1.442695
      %v805 = vpow.pop %v804
      %v806 = vadd.f32 %v805, 1.0
      %v807 = vrcp.pop %v806
      %v808 = vmul.f32 %v806, %v807
      %v809 = vsub.f32 1.0, %v808
      %v810 = vmul.f32 %v807, %v809
      %v811 = vadd.f32 %v807, %v810
      %vm812 = vweird.f32 %v806
      %vm813 = vweird.f32 %v807
      %vm814 = vmor %vm812, %vm813
      %v815 = vsel %vm814, %v807, %v811
      %v816 = vand.u32 2147483647, %v806
      %vm817 = vcmp.eq.f32.partialorder %v816, 8.507059e+37
      %v818 = vand.u32 %v806, 2147483648
      %v819 = vor.u32 1.1754944e-38, %v818
      %v820 = vsel %vm817, %v819, %v815
      %v821 = vmul.f32 1.0, %v820
      %v822 = vtanh.pop %v802
      %v823 = vmul.f32 %v821, %v769
      %825 = vrot.lane.b32.xlu0 %v822, 32
      %v826 = vpop.permute.xlu0 %825
      %v828 = vmul.f32 %v821, %v826
      %830 = vrot.lane.b32.xlu0 %v828, 32
      %v831 = vpop.permute.xlu0 %830
      %v833 = vadd.f32 %v823, %v831
      %v834 = vtanh.pop %v833
      %836 = vrot.lane.b32.xlu0 %v834, 32
      %v837 = vpop.permute.xlu0 %836
      %v839 = vmul.f32 %v821, %v837
      %841 = vrot.lane.b32.xlu0 %v839, 64
      %v842 = vpop.permute.xlu0 %841
      %844 = vst.msk [vmem:[#allocation2 + $0x7] sm:$0x1] %vm395, %v842
      %p845 = scmp.eq.s32.totalorder %s19, 7
      // Predicated region
      $region49: #{network_forward.1} parent=43 // pred_check
        %p846 = pneg %p845
      $region50: #{network_forward.1} parent=43 // pred_check_branch
        %848 = sbr.rel (%p846) target = $region52
      $region51: #{network_forward.1} parent=43 // pred_region
        %v849 = vld [vmem:[#allocation2] sm:$0xff]
        %v850 = vld [vmem:[%s4] sm:$0xff]
        %v851 = vld [vmem:[%s4 + $0x8] sm:$0xff]
        %v852 = vld [vmem:[%s4 + $0x10] sm:$0xff]
        %v853 = vld [vmem:[%s4 + $0x18] sm:$0xff]
        %v854 = vld [vmem:[#allocation4] sm:$0x1]
        %v856 = vperm.slane %v854, 0
        %v859 = vsel %vm302, %v849, 0
        %861 = vmatpush.msra.mxu0 0.0
        %862 = vmatpush.msra.mxu0 0.0
        %863 = vmatpush.msra.mxu0 0.0
        %864 = vmatpush.msra.mxu0 0.0
        %865 = vmatpush.msra.mxu0 0.0
        %866 = vmatpush.msra.mxu0 0.0
        %867 = vmatpush.msra.mxu0 0.0
        %868 = vmatpush.msra.mxu0 0.0
        %869 = vmatpush.msra.mxu0 0.0
        %870 = vmatpush.msra.mxu0 0.0
        %871 = vmatpush.msra.mxu0 0.0
        %872 = vmatpush.msra.mxu0 0.0
        %873 = vmatpush.msra.mxu0 %v853
        %874 = vmatpush.msra.mxu0 %v852
        %875 = vmatpush.msra.mxu0 %v851
        %876 = vmatpush.msra.mxu0 %v850
        %877 = vmatmul.f32.gmra.mxu0 %v859
        %v878 = vpop.f32.mrf.mxu0
        %v879 = vadd.f32 %v856, %v878
        %880 = vdwg.mxu0
        %v881 = vxor.u32 %v879, 2147483648
        %v882 = vmul.f32 %v881, 1.442695
        %v883 = vpow.pop %v882
        %v884 = vadd.f32 %v883, 1.0
        %v885 = vrcp.pop %v884
        %v886 = vmul.f32 %v884, %v885
        %v887 = vsub.f32 1.0, %v886
        %v888 = vmul.f32 %v885, %v887
        %v889 = vadd.f32 %v885, %v888
        %vm890 = vweird.f32 %v884
        %vm891 = vweird.f32 %v885
        %vm892 = vmor %vm890, %vm891
        %v893 = vsel %vm892, %v885, %v889
        %v894 = vand.u32 2147483647, %v884
        %vm895 = vcmp.eq.f32.partialorder %v894, 8.507059e+37
        %v896 = vand.u32 %v884, 2147483648
        %v897 = vor.u32 1.1754944e-38, %v896
        %v898 = vsel %vm895, %v897, %v893
        %v899 = vmul.f32 1.0, %v898
        %vm900 = vcmask 7168
        %901 = vst.msk [vmem:[%s6] sm:$0xff] %vm900, %v899
      $region52: #{network_forward.1} parent=43 // pred_fallthru
        _
      // Predicated region
      $region53: #{network_forward.1} parent=43 // pred_check
        %p902 = pneg %p173
      $region54: #{network_forward.1} parent=43 // pred_check_branch
        %904 = sbr.rel (%p902) target = $region56
      $region55: #{network_forward.1} parent=43 // pred_region
        _
      $region56: #{network_forward.1} parent=43 // pred_fallthru
        _
      // Predicated region
      $region57: #{network_forward.1} parent=43 // pred_check
        %p905 = pneg %p173
      $region58: #{network_forward.1} parent=43 // pred_check_branch
        %907 = sbr.rel (%p905) target = $region60
      $region59: #{network_forward.1} parent=43 // pred_region
        _
      $region60: #{network_forward.1} parent=43 // pred_fallthru
        _
    $region44: #{network_forward.1} parent=5 // pred_fallthru
      _
    %p908 = scmp.le.s32.totalorder 2, %s14
    // Predicated region
    $region61: #{network_forward.1} parent=5 // pred_check
      %p909 = pneg %p908
    $region62: #{network_forward.1} parent=5 // pred_check_branch
      %911 = sbr.rel (%p909) target = $region64
    $region63: #{network_forward.1} parent=5 // pred_region
      %s912 = ssub.s32 %s14, 2
    $region64: #{network_forward.1} parent=5 // pred_fallthru
      _
  $region6: #{network_forward.1} parent=0 // loop_footer
    %s18 = sadd.s32 1, %s14
  $region7: #{network_forward.1} parent=0 // loop_footer_branch
    %13 = sbr.rel target = $region3
  $region8: #{network_forward.1} parent=0 // loop_exit
    _

</llo_original>
